<compile_context>
chip_gen: v6e
topology: v6e:2x2x1
jax: 0.10.0
libtpu: 0.0.40
codegen_flags: <defaults>
</compile_context>

<pallas_src>
import jax
import jax.numpy as jnp
from jax.experimental import pallas as pl
from jax.experimental.pallas import tpu as pltpu

_LANE = 128


def _make_fc_kernel(n_students):
    """Build kernel: o = sum_s dot(p_s, W_s) + b   (split-K over students)."""

    def kernel(*refs):
        p_refs = refs[:n_students]            # each [B, C]
        w_ref = refs[n_students]              # [n_students, C, out_pad]
        b_ref = refs[n_students + 1]          # [1, out_pad]
        o_ref = refs[n_students + 2]          # [B, out_pad]

        acc = jnp.dot(p_refs[0][...], w_ref[0],
                      preferred_element_type=jnp.float32)
        for s in range(1, n_students):
            acc = acc + jnp.dot(p_refs[s][...], w_ref[s],
                                preferred_element_type=jnp.float32)
        o_ref[...] = (acc + b_ref[...]).astype(o_ref.dtype)

    return kernel


def prepare_fc_params(weight, bias, n_students):
    """One-time parameter prep (outside the forward path).

    weight: [out_f, in_f]  (PyTorch nn.Linear convention, in_f = C*n_students)
    bias:   [out_f]
    Returns:
      w_prep: [n_students, C, out_pad]  per-student slices, transposed, padded
      b_prep: [1, out_pad]
      out_f:  original out_features (to slice the padded output back)
    """
    out_f, in_f = weight.shape
    assert in_f % n_students == 0
    c = in_f // n_students
    out_pad = ((out_f + _LANE - 1) // _LANE) * _LANE

    w = weight.reshape(out_f, n_students, c)           # [out_f, S, C]
    w = jnp.transpose(w, (1, 2, 0))                    # [S, C, out_f]
    w = jnp.pad(w, ((0, 0), (0, 0), (0, out_pad - out_f)))
    b = jnp.pad(bias, (0, out_pad - out_f)).reshape(1, out_pad)
    return w, b, out_f


def fc_student_ensembler(predictions_arr, w_prep, b_prep, out_features):
    """Pallas forward of FC_StudentEnsembler.

    predictions_arr: list of 2 or 3 arrays, each [B, num_classes]
    w_prep, b_prep:  from prepare_fc_params
    """
    n_students, c, out_pad = w_prep.shape
    assert len(predictions_arr) == n_students
    b_sz = predictions_arr[0].shape[0]
    dtype = predictions_arr[0].dtype

    vmem = pl.BlockSpec(memory_space=pltpu.MemorySpace.VMEM)
    cost = pl.CostEstimate(
        flops=2 * b_sz * n_students * c * out_pad,
        transcendentals=0,
        bytes_accessed=4 * (b_sz * n_students * c
                            + n_students * c * out_pad
                            + out_pad
                            + b_sz * out_pad),
    )

    out = pl.pallas_call(
        _make_fc_kernel(n_students),
        out_shape=jax.ShapeDtypeStruct((b_sz, out_pad), dtype),
        in_specs=[vmem] * (n_students + 2),
        out_specs=vmem,
        cost_estimate=cost,
    )(*predictions_arr, w_prep, b_prep)

    if out_pad != out_features:
        out = out[:, :out_features]
    return out


def _reference(predictions_arr, weight, bias):
    x = jnp.concatenate(predictions_arr, axis=1)
    return x @ weight.T + bias


if __name__ == "__main__":
    num_classes = 100
    batch = 8

    key = jax.random.PRNGKey(0)
    k1, k2, k3, kw, kb, kw2, kb2 = jax.random.split(key, 7)

    # --- 3-student configuration (module default) -------------------------
    n_students = 3
    p1 = jax.random.normal(k1, (batch, num_classes), dtype=jnp.float32)
    p2 = jax.random.normal(k2, (batch, num_classes), dtype=jnp.float32)
    p3 = jax.random.normal(k3, (batch, num_classes), dtype=jnp.float32)
    preds3 = [p1, p2, p3]

    in_f = num_classes * n_students
    bound = 1.0 / jnp.sqrt(jnp.float32(in_f))
    weight3 = jax.random.uniform(kw, (num_classes, in_f), jnp.float32,
                                 -bound, bound)
    bias3 = jax.random.uniform(kb, (num_classes,), jnp.float32, -bound, bound)

    w_prep3, b_prep3, out_f3 = prepare_fc_params(weight3, bias3, n_students)
    out3 = jax.block_until_ready(
        fc_student_ensembler(preds3, w_prep3, b_prep3, out_f3))
    ref3 = _reference(preds3, weight3, bias3)
    assert out3.shape == (batch, num_classes)
    assert jnp.allclose(out3, ref3, atol=1e-4, rtol=1e-4)

    # --- 2-student configuration (other branch of the module) -------------
    n2 = 2
    preds2 = [p1, p2]
    in_f2 = num_classes * n2
    bound2 = 1.0 / jnp.sqrt(jnp.float32(in_f2))
    weight2 = jax.random.uniform(kw2, (num_classes, in_f2), jnp.float32,
                                 -bound2, bound2)
    bias2 = jax.random.uniform(kb2, (num_classes,), jnp.float32,
                               -bound2, bound2)
    w_prep2, b_prep2, out_f2 = prepare_fc_params(weight2, bias2, n2)
    out2 = jax.block_until_ready(
        fc_student_ensembler(preds2, w_prep2, b_prep2, out_f2))
    ref2 = _reference(preds2, weight2, bias2)
    assert out2.shape == (batch, num_classes)
    assert jnp.allclose(out2, ref2, atol=1e-4, rtol=1e-4)

    print("KERNEL_OK")
</pallas_src>

<mosaic_0001>
module attributes {stable_mosaic.version = 11 : i64} {
  func.func @kernel(%arg0: memref<8x100xf32, #tpu.memory_space<vmem>>, %arg1: memref<8x100xf32, #tpu.memory_space<vmem>>, %arg2: memref<8x100xf32, #tpu.memory_space<vmem>>, %arg3: memref<3x100x128xf32, #tpu.memory_space<vmem>>, %arg4: memref<1x128xf32, #tpu.memory_space<vmem>>, %arg5: memref<8x128xf32, #tpu.memory_space<vmem>>) attributes {dimension_semantics = [], scalar_prefetch = 0 : i64, scratch_operands = 0 : i64, tpu.core_type = #tpu.core_type<tc>} {
    %c0 = arith.constant 0 : index
    %c0_0 = arith.constant 0 : index
    %0 = vector.load %arg0[%c0, %c0_0] : memref<8x100xf32, #tpu.memory_space<vmem>>, vector<8x100xf32>
    %c0_1 = arith.constant 0 : index
    %c0_2 = arith.constant 0 : index
    %c0_3 = arith.constant 0 : index
    %1 = vector.load %arg3[%c0_1, %c0_2, %c0_3] : memref<3x100x128xf32, #tpu.memory_space<vmem>>, vector<1x100x128xf32>
    %2 = vector.shape_cast %1 : vector<1x100x128xf32> to vector<100x128xf32>
    %cst = arith.constant dense<0.000000e+00> : vector<8x128xf32>
    %3 = tpu.matmul %0, %2, %cst {dimension_numbers = #tpu.dot_dimension_numbers<[1], [0], [0], [1], [0, 0, 1, 1], [], []>} : vector<8x100xf32>, vector<100x128xf32>, vector<8x128xf32> -> vector<8x128xf32>
    %c0_4 = arith.constant 0 : index
    %c0_5 = arith.constant 0 : index
    %4 = vector.load %arg1[%c0_4, %c0_5] : memref<8x100xf32, #tpu.memory_space<vmem>>, vector<8x100xf32>
    %c1 = arith.constant 1 : index
    %c0_6 = arith.constant 0 : index
    %c0_7 = arith.constant 0 : index
    %5 = vector.load %arg3[%c1, %c0_6, %c0_7] : memref<3x100x128xf32, #tpu.memory_space<vmem>>, vector<1x100x128xf32>
    %6 = vector.shape_cast %5 : vector<1x100x128xf32> to vector<100x128xf32>
    %cst_8 = arith.constant dense<0.000000e+00> : vector<8x128xf32>
    %7 = tpu.matmul %4, %6, %cst_8 {dimension_numbers = #tpu.dot_dimension_numbers<[1], [0], [0], [1], [0, 0, 1, 1], [], []>} : vector<8x100xf32>, vector<100x128xf32>, vector<8x128xf32> -> vector<8x128xf32>
    %8 = arith.addf %3, %7 : vector<8x128xf32>
    %c0_9 = arith.constant 0 : index
    %c0_10 = arith.constant 0 : index
    %9 = vector.load %arg2[%c0_9, %c0_10] : memref<8x100xf32, #tpu.memory_space<vmem>>, vector<8x100xf32>
    %c2 = arith.constant 2 : index
    %c0_11 = arith.constant 0 : index
    %c0_12 = arith.constant 0 : index
    %10 = vector.load %arg3[%c2, %c0_11, %c0_12] : memref<3x100x128xf32, #tpu.memory_space<vmem>>, vector<1x100x128xf32>
    %11 = vector.shape_cast %10 : vector<1x100x128xf32> to vector<100x128xf32>
    %cst_13 = arith.constant dense<0.000000e+00> : vector<8x128xf32>
    %12 = tpu.matmul %9, %11, %cst_13 {dimension_numbers = #tpu.dot_dimension_numbers<[1], [0], [0], [1], [0, 0, 1, 1], [], []>} : vector<8x100xf32>, vector<100x128xf32>, vector<8x128xf32> -> vector<8x128xf32>
    %13 = arith.addf %8, %12 : vector<8x128xf32>
    %c0_14 = arith.constant 0 : index
    %c0_15 = arith.constant 0 : index
    %14 = vector.load %arg4[%c0_14, %c0_15] : memref<1x128xf32, #tpu.memory_space<vmem>>, vector<1x128xf32>
    %15 = vector.broadcast %14 : vector<1x128xf32> to vector<8x128xf32>
    %16 = arith.addf %13, %15 : vector<8x128xf32>
    %c0_16 = arith.constant 0 : index
    %c0_17 = arith.constant 0 : index
    %17 = vector.load %arg5[%c0_16, %c0_17] : memref<8x128xf32, #tpu.memory_space<vmem>>, vector<8x128xf32>
    tpu.vector_store %arg5[%c0_16, %c0_17], %16 {strides = array<i32>} : memref<8x128xf32, #tpu.memory_space<vmem>>, vector<8x128xf32>,
    return
  }
}

</mosaic_0001>

<llo_original>
// kernel: tpu_custom_call.1
$region0: #{tpu_custom_call.1}
  #allocation0 [shape = 'u32[]', space=smem, size = 0x4, offset = 0x4, fixed_abs, tag = 'smem constant byte address 0x4 - core index']
  #allocation1 [shape = 'u32[144,128]{1,0:T(1,128)}', space=vmem, size = 0x12000, scoped, tag = 'internal scratch']
  %s0 = inlined_call_operand.hbm [shape: f32[8,100], index: 0, kind: input, shape index: {}]
  %s1 = inlined_call_operand.hbm [shape: f32[8,100], index: 1, kind: input, shape index: {}]
  %s2 = inlined_call_operand.hbm [shape: f32[8,100], index: 2, kind: input, shape index: {}]
  %s3 = inlined_call_operand.hbm [shape: f32[3,100,128], index: 3, kind: input, shape index: {}]
  %s4 = inlined_call_operand.vmem [shape: f32[1,128], index: 4, kind: input, shape index: {}]
  %s5 = inlined_call_operand.hbm [shape: f32[8,128], index: 5, kind: output, shape index: {}]
  %s6 = sld [smem:[#allocation0]]
  $region46: #{tpu_custom_call.1} parent=0
    _
  %s8 = ssub.s32 1, %s6
  %s9 = scalar_select 0, %s8, %s6
  $region1: #{tpu_custom_call.1} parent=0
    #allocation2 [shape = 'u8[4096]{0}', space=vmem, size = 0x1000, scoped, tag = 'input window, operand 0, single buffered']
    #allocation3 [shape = 's32[1]{0}', space=sflag, size = 0x4, scoped, tag = 'scoped memory for tpu_custom_call.1']
    #allocation4 [shape = 's32[1]{0}', space=sflag, size = 0x4, scoped, tag = 'scoped memory for tpu_custom_call.1']
    #allocation5 [shape = 'u8[4096]{0}', space=vmem, size = 0x1000, scoped, tag = 'input window, operand 1, single buffered']
    #allocation6 [shape = 's32[1]{0}', space=sflag, size = 0x4, scoped, tag = 'scoped memory for tpu_custom_call.1']
    #allocation7 [shape = 'u8[4096]{0}', space=vmem, size = 0x1000, scoped, tag = 'input window, operand 2, single buffered']
    #allocation8 [shape = 'u8[159744]{0}', space=vmem, size = 0x27000, scoped, tag = 'input window, operand 3, single buffered']
    #allocation9 [shape = 's32[1]{0}', space=sflag, size = 0x4, scoped, tag = 'scoped memory for tpu_custom_call.1']
    #allocation10 [shape = 'u8[4096]{0}', space=vmem, size = 0x1000, scoped, tag = 'output window, operand 0, single buffered']
    %10 = vsyncpa [#allocation3], 0
    %11 = vsyncpa [#allocation6], 0
    %12 = vsyncpa [#allocation9], 0
    %13 = vsyncpa [#allocation4], 0
    // Predicated region
    $region2: #{tpu_custom_call.1} parent=1 // pred_check
      _
    $region3: #{tpu_custom_call.1} parent=1 // pred_check_branch
      %15 = sbr.rel (0) target = $region5
    $region4: #{tpu_custom_call.1} parent=1 // pred_region
      %s17 = ssub.s32 128, 128
      %18 = vsyncadd [#allocation3], %s17
      %s20 = sshll.u32 [#allocation2], 4
      %s21 = int_to_ptr.vmem [resolvable:$true] %s20
      %23 = dma.hbm_to_vmem [thread:$0]  %s0, 128, %s21, [#allocation3]
    $region5: #{tpu_custom_call.1} parent=1 // pred_fallthru
      _
    // Predicated region
    $region6: #{tpu_custom_call.1} parent=1 // pred_check
      _
    $region7: #{tpu_custom_call.1} parent=1 // pred_check_branch
      %25 = sbr.rel (0) target = $region9
    $region8: #{tpu_custom_call.1} parent=1 // pred_region
      %s27 = ssub.s32 128, 128
      %28 = vsyncadd [#allocation6], %s27
      %s30 = sshll.u32 [#allocation5], 4
      %s31 = int_to_ptr.vmem [resolvable:$true] %s30
      %33 = dma.hbm_to_vmem [thread:$0]  %s1, 128, %s31, [#allocation6]
    $region9: #{tpu_custom_call.1} parent=1 // pred_fallthru
      _
    // Predicated region
    $region10: #{tpu_custom_call.1} parent=1 // pred_check
      _
    $region11: #{tpu_custom_call.1} parent=1 // pred_check_branch
      %35 = sbr.rel (0) target = $region13
    $region12: #{tpu_custom_call.1} parent=1 // pred_region
      %s37 = ssub.s32 128, 128
      %38 = vsyncadd [#allocation6], %s37
      %s40 = sshll.u32 [#allocation7], 4
      %s41 = int_to_ptr.vmem [resolvable:$true] %s40
      %43 = dma.hbm_to_vmem [thread:$0]  %s2, 128, %s41, [#allocation6]
    $region13: #{tpu_custom_call.1} parent=1 // pred_fallthru
      _
    // Predicated region
    $region14: #{tpu_custom_call.1} parent=1 // pred_check
      _
    $region15: #{tpu_custom_call.1} parent=1 // pred_check_branch
      %45 = sbr.rel (0) target = $region17
    $region16: #{tpu_custom_call.1} parent=1 // pred_region
      %s47 = ssub.s32 4992, 4992
      %48 = vsyncadd [#allocation9], %s47
      %s49 = sshll.u32 [#allocation8], 4
      %s50 = int_to_ptr.vmem [resolvable:$true] %s49
      %55 = dma.hbm_to_vmem [thread:$0]  %s3, 4992, %s50, [#allocation9], 128, 128, 8
    $region17: #{tpu_custom_call.1} parent=1 // pred_fallthru
      _
    // Predicated region
    $region18: #{tpu_custom_call.1} parent=1 // pred_check
      _
    $region19: #{tpu_custom_call.1} parent=1 // pred_check_branch
      %57 = sbr.rel (0) target = $region21
    $region20: #{tpu_custom_call.1} parent=1 // pred_region
      _
    $region21: #{tpu_custom_call.1} parent=1 // pred_fallthru
      _
    // Predicated region
    $region22: #{tpu_custom_call.1} parent=1 // pred_check
      _
    $region23: #{tpu_custom_call.1} parent=1 // pred_check_branch
      %59 = sbr.rel (0) target = $region25
    $region24: #{tpu_custom_call.1} parent=1 // pred_region
      %60 = dma.done [#allocation3], 128
    $region25: #{tpu_custom_call.1} parent=1 // pred_fallthru
      _
    // Predicated region
    $region26: #{tpu_custom_call.1} parent=1 // pred_check
      _
    $region27: #{tpu_custom_call.1} parent=1 // pred_check_branch
      %62 = sbr.rel (0) target = $region29
    $region28: #{tpu_custom_call.1} parent=1 // pred_region
      %63 = dma.done [#allocation6], 128
    $region29: #{tpu_custom_call.1} parent=1 // pred_fallthru
      _
    // Predicated region
    $region30: #{tpu_custom_call.1} parent=1 // pred_check
      _
    $region31: #{tpu_custom_call.1} parent=1 // pred_check_branch
      %65 = sbr.rel (0) target = $region33
    $region32: #{tpu_custom_call.1} parent=1 // pred_region
      %66 = dma.done [#allocation6], 128
    $region33: #{tpu_custom_call.1} parent=1 // pred_fallthru
      _
    // Predicated region
    $region34: #{tpu_custom_call.1} parent=1 // pred_check
      _
    $region35: #{tpu_custom_call.1} parent=1 // pred_check_branch
      %68 = sbr.rel (0) target = $region37
    $region36: #{tpu_custom_call.1} parent=1 // pred_region
      %69 = dma.done [#allocation9], 4992
    $region37: #{tpu_custom_call.1} parent=1 // pred_fallthru
      _
    %v70 = vld [vmem:[#allocation2] sm:$0xff]
    %v71 = vld [vmem:[#allocation8] sm:$0xff]
    %v72 = vld [vmem:[#allocation8 + $0x8] sm:$0xff]
    %v73 = vld [vmem:[#allocation8 + $0x10] sm:$0xff]
    %v74 = vld [vmem:[#allocation8 + $0x18] sm:$0xff]
    %v75 = vld [vmem:[#allocation8 + $0x20] sm:$0xff]
    %v76 = vld [vmem:[#allocation8 + $0x28] sm:$0xff]
    %v77 = vld [vmem:[#allocation8 + $0x30] sm:$0xff]
    %v78 = vld [vmem:[#allocation8 + $0x38] sm:$0xff]
    %v79 = vld [vmem:[#allocation8 + $0x40] sm:$0xff]
    %v80 = vld [vmem:[#allocation8 + $0x48] sm:$0xff]
    %v81 = vld [vmem:[#allocation8 + $0x50] sm:$0xff]
    %v82 = vld [vmem:[#allocation8 + $0x58] sm:$0xff]
    %v83 = vld [vmem:[#allocation8 + $0x60] sm:$0xf]
    %v84 = vld [vmem:[#allocation5] sm:$0xff]
    %s85 = scalar_lea.vmem [#allocation8], 104
    %v86 = vld [vmem:[%s85] sm:$0xff]
    %v87 = vld [vmem:[%s85 + $0x8] sm:$0xff]
    %v88 = vld [vmem:[%s85 + $0x10] sm:$0xff]
    %v89 = vld [vmem:[%s85 + $0x18] sm:$0xff]
    %v90 = vld [vmem:[%s85 + $0x20] sm:$0xff]
    %v91 = vld [vmem:[%s85 + $0x28] sm:$0xff]
    %v92 = vld [vmem:[%s85 + $0x30] sm:$0xff]
    %v93 = vld [vmem:[%s85 + $0x38] sm:$0xff]
    %v94 = vld [vmem:[%s85 + $0x40] sm:$0xff]
    %v95 = vld [vmem:[%s85 + $0x48] sm:$0xff]
    %v96 = vld [vmem:[%s85 + $0x50] sm:$0xff]
    %v97 = vld [vmem:[%s85 + $0x58] sm:$0xff]
    %v98 = vld [vmem:[%s85 + $0x60] sm:$0xf]
    %vm99 = vcmask 818176
    %v101 = vsel %vm99, %v84, 0
    %vm103 = vcmask 1043456
    %v105 = vsel %vm103, %v98, 0
    %107 = vmatprep.subr.mxu0 0.0
    %108 = vmatpush1.msra.mxu0 0.0
    %109 = vmatprep.subr.mxu0 0.0
    %110 = vmatpush1.msra.mxu0 0.0
    %111 = vmatprep.subr.mxu0 0.0
    %112 = vmatpush1.msra.mxu0 0.0
    %113 = vmatprep.subr.mxu0 0.0
    %114 = vmatpush1.msra.mxu0 %v105
    %115 = vmatprep.subr.mxu0 0.0
    %116 = vmatpush1.msra.mxu0 %v97
    %117 = vmatprep.subr.mxu0 0.0
    %118 = vmatpush1.msra.mxu0 %v96
    %119 = vmatprep.subr.mxu0 0.0
    %120 = vmatpush1.msra.mxu0 %v95
    %121 = vmatprep.subr.mxu0 0.0
    %122 = vmatpush1.msra.mxu0 %v94
    %123 = vmatprep.subr.mxu0 0.0
    %124 = vmatpush1.msra.mxu0 %v93
    %125 = vmatprep.subr.mxu0 0.0
    %126 = vmatpush1.msra.mxu0 %v92
    %127 = vmatprep.subr.mxu0 0.0
    %128 = vmatpush1.msra.mxu0 %v91
    %129 = vmatprep.subr.mxu0 0.0
    %130 = vmatpush1.msra.mxu0 %v90
    %131 = vmatprep.subr.mxu0 0.0
    %132 = vmatpush1.msra.mxu0 %v89
    %133 = vmatprep.subr.mxu0 0.0
    %134 = vmatpush1.msra.mxu0 %v88
    %135 = vmatprep.subr.mxu0 0.0
    %136 = vmatpush1.msra.mxu0 %v87
    %137 = vmatprep.subr.mxu0 0.0
    %138 = vmatpush1.msra.mxu0 %v86
    %139 = vmatprep.subr.mxu0 0.0
    %140 = vmatpush2.msra.mxu0 0.0
    %141 = vmatprep.subr.mxu0 0.0
    %142 = vmatpush2.msra.mxu0 0.0
    %143 = vmatprep.subr.mxu0 0.0
    %144 = vmatpush2.msra.mxu0 0.0
    %145 = vmatprep.subr.mxu0 0.0
    %146 = vmatpush2.msra.mxu0 0.0
    %147 = vmatprep.subr.mxu0 0.0
    %148 = vmatpush2.msra.mxu0 0.0
    %149 = vmatprep.subr.mxu0 0.0
    %150 = vmatpush2.msra.mxu0 0.0
    %151 = vmatprep.subr.mxu0 0.0
    %152 = vmatpush2.msra.mxu0 0.0
    %153 = vmatprep.subr.mxu0 0.0
    %154 = vmatpush2.msra.mxu0 0.0
    %155 = vmatprep.subr.mxu0 0.0
    %156 = vmatpush2.msra.mxu0 0.0
    %157 = vmatprep.subr.mxu0 0.0
    %158 = vmatpush2.msra.mxu0 0.0
    %159 = vmatprep.subr.mxu0 0.0
    %160 = vmatpush2.msra.mxu0 0.0
    %161 = vmatprep.subr.mxu0 0.0
    %162 = vmatpush2.msra.mxu0 0.0
    %163 = vmatprep.subr.mxu0 0.0
    %164 = vmatpush2.msra.mxu0 0.0
    %165 = vmatprep.subr.mxu0 0.0
    %166 = vmatpush2.msra.mxu0 0.0
    %167 = vmatprep.subr.mxu0 0.0
    %168 = vmatpush2.msra.mxu0 0.0
    %169 = vmatprep.subr.mxu0 0.0
    %170 = vmatpush2.msra.mxu0 0.0
    %171 = vmatprep.mubr.f32.mxu0 0.0
    %172 = vmatmul.mubr.f32.gmra.mxu0 %v101
    %v173 = vpop.f32.mrf.mxu0
    %v174 = vadd.f32 0.0, %v173
    %v175 = vpop.f32.mrf.mxu0
    %176 = vdwg.mxu0
    %v178 = vsel %vm99, %v70, 0
    %v181 = vsel %vm103, %v83, 0
    %183 = vmatprep.subr.mxu0 0.0
    %184 = vmatpush1.msra.mxu0 0.0
    %185 = vmatprep.subr.mxu0 0.0
    %186 = vmatpush1.msra.mxu0 0.0
    %187 = vmatprep.subr.mxu0 0.0
    %188 = vmatpush1.msra.mxu0 0.0
    %189 = vmatprep.subr.mxu0 0.0
    %190 = vmatpush1.msra.mxu0 %v181
    %191 = vmatprep.subr.mxu0 0.0
    %192 = vmatpush1.msra.mxu0 %v82
    %193 = vmatprep.subr.mxu0 0.0
    %194 = vmatpush1.msra.mxu0 %v81
    %195 = vmatprep.subr.mxu0 0.0
    %196 = vmatpush1.msra.mxu0 %v80
    %197 = vmatprep.subr.mxu0 0.0
    %198 = vmatpush1.msra.mxu0 %v79
    %199 = vmatprep.subr.mxu0 0.0
    %200 = vmatpush1.msra.mxu0 %v78
    %201 = vmatprep.subr.mxu0 0.0
    %202 = vmatpush1.msra.mxu0 %v77
    %203 = vmatprep.subr.mxu0 0.0
    %204 = vmatpush1.msra.mxu0 %v76
    %205 = vmatprep.subr.mxu0 0.0
    %206 = vmatpush1.msra.mxu0 %v75
    %207 = vmatprep.subr.mxu0 0.0
    %208 = vmatpush1.msra.mxu0 %v74
    %209 = vmatprep.subr.mxu0 0.0
    %210 = vmatpush1.msra.mxu0 %v73
    %211 = vmatprep.subr.mxu0 0.0
    %212 = vmatpush1.msra.mxu0 %v72
    %213 = vmatprep.subr.mxu0 0.0
    %214 = vmatpush1.msra.mxu0 %v71
    %215 = vmatprep.subr.mxu0 0.0
    %216 = vmatpush2.msra.mxu0 0.0
    %217 = vmatprep.subr.mxu0 0.0
    %218 = vmatpush2.msra.mxu0 0.0
    %219 = vmatprep.subr.mxu0 0.0
    %220 = vmatpush2.msra.mxu0 0.0
    %221 = vmatprep.subr.mxu0 0.0
    %222 = vmatpush2.msra.mxu0 0.0
    %223 = vmatprep.subr.mxu0 0.0
    %224 = vmatpush2.msra.mxu0 0.0
    %225 = vmatprep.subr.mxu0 0.0
    %226 = vmatpush2.msra.mxu0 0.0
    %227 = vmatprep.subr.mxu0 0.0
    %228 = vmatpush2.msra.mxu0 0.0
    %229 = vmatprep.subr.mxu0 0.0
    %230 = vmatpush2.msra.mxu0 0.0
    %231 = vmatprep.subr.mxu0 0.0
    %232 = vmatpush2.msra.mxu0 0.0
    %233 = vmatprep.subr.mxu0 0.0
    %234 = vmatpush2.msra.mxu0 0.0
    %235 = vmatprep.subr.mxu0 0.0
    %236 = vmatpush2.msra.mxu0 0.0
    %237 = vmatprep.subr.mxu0 0.0
    %238 = vmatpush2.msra.mxu0 0.0
    %239 = vmatprep.subr.mxu0 0.0
    %240 = vmatpush2.msra.mxu0 0.0
    %241 = vmatprep.subr.mxu0 0.0
    %242 = vmatpush2.msra.mxu0 0.0
    %243 = vmatprep.subr.mxu0 0.0
    %244 = vmatpush2.msra.mxu0 0.0
    %245 = vmatprep.subr.mxu0 0.0
    %246 = vmatpush2.msra.mxu0 0.0
    %247 = vmatprep.mubr.f32.mxu0 0.0
    %248 = vmatmul.mubr.f32.gmra.mxu0 %v178
    %v249 = vpop.f32.mrf.mxu0
    %v250 = vadd.f32 %v174, %v249
    %v251 = vpop.f32.mrf.mxu0
    %252 = vdwg.mxu0
    %v253 = vld [vmem:[#allocation7] sm:$0xff]
    %s254 = scalar_lea.vmem [#allocation8], 208
    %v255 = vld [vmem:[%s254] sm:$0xff]
    %v256 = vld [vmem:[%s254 + $0x8] sm:$0xff]
    %v257 = vld [vmem:[%s254 + $0x10] sm:$0xff]
    %v258 = vld [vmem:[%s254 + $0x18] sm:$0xff]
    %v259 = vld [vmem:[%s254 + $0x20] sm:$0xff]
    %v260 = vld [vmem:[%s254 + $0x28] sm:$0xff]
    %v261 = vld [vmem:[%s254 + $0x30] sm:$0xff]
    %v262 = vld [vmem:[%s254 + $0x38] sm:$0xff]
    %v263 = vld [vmem:[%s254 + $0x40] sm:$0xff]
    %v264 = vld [vmem:[%s254 + $0x48] sm:$0xff]
    %v265 = vld [vmem:[%s254 + $0x50] sm:$0xff]
    %v266 = vld [vmem:[%s254 + $0x58] sm:$0xff]
    %v267 = vld [vmem:[%s254 + $0x60] sm:$0xf]
    %v269 = vsel %vm99, %v253, 0
    %v272 = vsel %vm103, %v267, 0
    %274 = vmatprep.subr.mxu0 0.0
    %275 = vmatpush1.msra.mxu0 0.0
    %276 = vmatprep.subr.mxu0 0.0
    %277 = vmatpush1.msra.mxu0 0.0
    %278 = vmatprep.subr.mxu0 0.0
    %279 = vmatpush1.msra.mxu0 0.0
    %280 = vmatprep.subr.mxu0 0.0
    %281 = vmatpush1.msra.mxu0 %v272
    %282 = vmatprep.subr.mxu0 0.0
    %283 = vmatpush1.msra.mxu0 %v266
    %284 = vmatprep.subr.mxu0 0.0
    %285 = vmatpush1.msra.mxu0 %v265
    %286 = vmatprep.subr.mxu0 0.0
    %287 = vmatpush1.msra.mxu0 %v264
    %288 = vmatprep.subr.mxu0 0.0
    %289 = vmatpush1.msra.mxu0 %v263
    %290 = vmatprep.subr.mxu0 0.0
    %291 = vmatpush1.msra.mxu0 %v262
    %292 = vmatprep.subr.mxu0 0.0
    %293 = vmatpush1.msra.mxu0 %v261
    %294 = vmatprep.subr.mxu0 0.0
    %295 = vmatpush1.msra.mxu0 %v260
    %296 = vmatprep.subr.mxu0 0.0
    %297 = vmatpush1.msra.mxu0 %v259
    %298 = vmatprep.subr.mxu0 0.0
    %299 = vmatpush1.msra.mxu0 %v258
    %300 = vmatprep.subr.mxu0 0.0
    %301 = vmatpush1.msra.mxu0 %v257
    %302 = vmatprep.subr.mxu0 0.0
    %303 = vmatpush1.msra.mxu0 %v256
    %304 = vmatprep.subr.mxu0 0.0
    %305 = vmatpush1.msra.mxu0 %v255
    %306 = vmatprep.subr.mxu0 0.0
    %307 = vmatpush2.msra.mxu0 0.0
    %308 = vmatprep.subr.mxu0 0.0
    %309 = vmatpush2.msra.mxu0 0.0
    %310 = vmatprep.subr.mxu0 0.0
    %311 = vmatpush2.msra.mxu0 0.0
    %312 = vmatprep.subr.mxu0 0.0
    %313 = vmatpush2.msra.mxu0 0.0
    %314 = vmatprep.subr.mxu0 0.0
    %315 = vmatpush2.msra.mxu0 0.0
    %316 = vmatprep.subr.mxu0 0.0
    %317 = vmatpush2.msra.mxu0 0.0
    %318 = vmatprep.subr.mxu0 0.0
    %319 = vmatpush2.msra.mxu0 0.0
    %320 = vmatprep.subr.mxu0 0.0
    %321 = vmatpush2.msra.mxu0 0.0
    %322 = vmatprep.subr.mxu0 0.0
    %323 = vmatpush2.msra.mxu0 0.0
    %324 = vmatprep.subr.mxu0 0.0
    %325 = vmatpush2.msra.mxu0 0.0
    %326 = vmatprep.subr.mxu0 0.0
    %327 = vmatpush2.msra.mxu0 0.0
    %328 = vmatprep.subr.mxu0 0.0
    %329 = vmatpush2.msra.mxu0 0.0
    %330 = vmatprep.subr.mxu0 0.0
    %331 = vmatpush2.msra.mxu0 0.0
    %332 = vmatprep.subr.mxu0 0.0
    %333 = vmatpush2.msra.mxu0 0.0
    %334 = vmatprep.subr.mxu0 0.0
    %335 = vmatpush2.msra.mxu0 0.0
    %336 = vmatprep.subr.mxu0 0.0
    %337 = vmatpush2.msra.mxu0 0.0
    %338 = vmatprep.mubr.f32.mxu0 0.0
    %339 = vmatmul.mubr.f32.gmra.mxu0 %v269
    %v340 = vpop.f32.mrf.mxu0
    %v341 = vadd.f32 0.0, %v340
    %v342 = vpop.f32.mrf.mxu0
    %343 = vdwg.mxu0
    %v344 = vadd.f32 %v250, %v341
    %v345 = vld [vmem:[%s4] sm:$0x1]
    %v347 = vlaneseq
    %v348 = vshrl.u32 %v347, 7
    %v349 = vsub.s32 0, %v348
    %v350 = vrot.slane %v345, %v349
    %v352 = vadd.f32 %v344, %v350
    %353 = vst [vmem:[#allocation10] sm:$0xff] %v352
    // Predicated region
    $region38: #{tpu_custom_call.1} parent=1 // pred_check
      _
    $region39: #{tpu_custom_call.1} parent=1 // pred_check_branch
      %355 = sbr.rel (0) target = $region41
    $region40: #{tpu_custom_call.1} parent=1 // pred_region
      %s357 = ssub.s32 128, 128
      %358 = vsyncadd [#allocation4], %s357
      %s360 = sshll.u32 [#allocation10], 4
      %s361 = int_to_ptr.vmem [resolvable:$true] %s360
      %363 = dma.vmem_to_hbm [thread:$0]  %s361, 128, %s5, [#allocation4]
    $region41: #{tpu_custom_call.1} parent=1 // pred_fallthru
      _
    // Predicated region
    $region42: #{tpu_custom_call.1} parent=1 // pred_check
      _
    $region43: #{tpu_custom_call.1} parent=1 // pred_check_branch
      %365 = sbr.rel (0) target = $region45
    $region44: #{tpu_custom_call.1} parent=1 // pred_region
      %366 = dma.done [#allocation4], 128
    $region45: #{tpu_custom_call.1} parent=1 // pred_fallthru
      _
    %367 = vsyncpa [#allocation3], 1
    %368 = vsyncpa [#allocation6], 1
    %369 = vsyncpa [#allocation9], 1
    %370 = vsyncpa [#allocation4], 1

</llo_original>
